<compile_context>
chip_gen: v6e
topology: v6e:2x2x1
jax: 0.10.0
libtpu: 0.0.40
codegen_flags: <defaults>
</compile_context>

<pallas_src>
import jax
import jax.numpy as jnp
from jax.experimental import pallas as pl
from jax.experimental.pallas import tpu as pltpu


def _decoder_kernel(seq_len: int, batch: int):
    """Build the kernel body with static sequence length / batch size."""

    def kernel(x_ref, wih_ref, whh_ref, b_rnn_ref, wfc_ref, bfc_ref, out_ref, hs_ref):
        # x_ref:    (B, H_in)    latent batch (same RNN input at every timestep)
        # wih_ref:  (H_in, H)    input->hidden  (pre-transposed from torch layout)
        # whh_ref:  (H, H)       hidden->hidden (pre-transposed)
        # b_rnn_ref:(1, H)       folded RNN bias = b_ih + b_hh
        # wfc_ref:  (H, Cpad)    fc weight (transposed), zero-padded to 128 lanes
        # bfc_ref:  (1, Cpad)    fc bias, zero-padded to 128 lanes
        # out_ref:  (T*B, Cpad)  time-major logits, lane-dense (row = t*B + b)
        # hs_ref:   (T*B, H)     VMEM scratch holding all hidden states

        # Input projection is loop-invariant (identical latent each step): compute it
        # once with both RNN biases folded in.
        xproj = (
            jnp.dot(x_ref[...], wih_ref[...], preferred_element_type=jnp.float32)
            + b_rnn_ref[...]
        )  # (B, H)
        whh = whh_ref[...]

        h = jnp.zeros_like(xproj)
        # Fully unrolled recurrence (seq_len is static). Only tanh(xproj + h @ W_hh)
        # is on the serial chain; hidden states are staged into scratch at static
        # sublane offsets, and the fc matmul + output store happen once afterwards.
        for t in range(seq_len):
            h = jnp.tanh(
                xproj + jnp.dot(h, whh, preferred_element_type=jnp.float32)
            )
            hs_ref[pl.ds(t * batch, batch), :] = h

        # Hoisted fc: one (T*B, H) x (H, Cpad) matmul and one full-lane bulk store.
        out_ref[...] = (
            jnp.dot(hs_ref[...], wfc_ref[...], preferred_element_type=jnp.float32)
            + bfc_ref[...]
        )

    return kernel


def decoder_forward(xs, params, seq_len, n_note_class):
    """xs: (B, H_in) float32 latent. Returns (B*T, C) logits (matches PyTorch)."""
    B, h_in = xs.shape
    w_ih, w_hh, b_ih, b_hh, w_fc, b_fc = params
    H = w_hh.shape[0]

    # Pad the class dimension to a multiple of 128 so the kernel's output store is
    # lane-dense (unmasked); the padding columns carry zero weight/bias.
    c_pad = max(128, ((n_note_class + 127) // 128) * 128)

    # torch stores weight_ih_l0 as (H, H_in), weight_hh_l0 as (H, H), fc.weight as
    # (C, H); transpose so the kernel does plain x @ W.
    w_ih_t = jnp.transpose(w_ih).astype(jnp.float32)          # (H_in, H)
    w_hh_t = jnp.transpose(w_hh).astype(jnp.float32)          # (H, H)
    b_rnn = (b_ih + b_hh).reshape(1, H).astype(jnp.float32)   # (1, H), folded once
    w_fc_pad = (
        jnp.zeros((H, c_pad), jnp.float32).at[:, :n_note_class].set(jnp.transpose(w_fc))
    )                                                          # (H, Cpad)
    b_fc_pad = (
        jnp.zeros((1, c_pad), jnp.float32).at[:, :n_note_class].set(b_fc.reshape(1, -1))
    )                                                          # (1, Cpad)

    flops = (
        2 * B * h_in * H                 # input projection (once)
        + seq_len * 2 * B * H * H        # recurrence
        + 2 * seq_len * B * H * c_pad    # hoisted fc
    )
    transcendentals = seq_len * B * H    # tanh
    bytes_accessed = 4 * (
        B * h_in + h_in * H + H * H + H + H * c_pad + c_pad + seq_len * B * c_pad
    )

    vmem = pl.BlockSpec(memory_space=pltpu.MemorySpace.VMEM)
    out_tmajor = pl.pallas_call(
        _decoder_kernel(seq_len, B),
        out_shape=jax.ShapeDtypeStruct((seq_len * B, c_pad), jnp.float32),
        in_specs=[vmem] * 6,
        out_specs=vmem,
        scratch_shapes=[pltpu.VMEM((seq_len * B, H), jnp.float32)],
        cost_estimate=pl.CostEstimate(
            flops=flops,
            transcendentals=transcendentals,
            bytes_accessed=bytes_accessed,
        ),
    )(xs.astype(jnp.float32), w_ih_t, w_hh_t, b_rnn, w_fc_pad, b_fc_pad)

    # (T*B, Cpad) time-major -> slice classes -> (T, B, C) -> (B, T, C) -> (B*T, C),
    # identical to torch's batch_first output followed by .reshape(-1, C).
    out = out_tmajor[:, :n_note_class].reshape(seq_len, B, n_note_class)
    return jnp.transpose(out, (1, 0, 2)).reshape(-1, n_note_class)


def _reference_forward(xs, params, seq_len, n_note_class):
    """Pure-JAX reference mirroring torch nn.RNN(tanh) + nn.Linear."""
    w_ih, w_hh, b_ih, b_hh, w_fc, b_fc = params
    B = xs.shape[0]
    h = jnp.zeros((B, w_hh.shape[0]), jnp.float32)
    ys = []
    for _ in range(seq_len):
        h = jnp.tanh(xs @ w_ih.T + b_ih + h @ w_hh.T + b_hh)
        ys.append(h @ w_fc.T + b_fc)
    y = jnp.stack(ys, axis=1)  # (B, T, C)
    return y.reshape(-1, n_note_class)


if __name__ == "__main__":
    # Small hyperparameters consistent with the module:
    #   sequence_length = data_resolution_nth_note * data_length_bars = 4 * 2 = 8
    #   n_note_class    = data_note_high - data_note_low + 1 = 71 - 60 + 1 = 12
    #   cmp_hidden_size (latent / rnn input)   = 32
    #   cmp_dec_rnn_hidden_size                = 32
    B = 2
    H_IN = 32
    H = 32
    SEQ_LEN = 4 * 2
    N_NOTE_CLASS = 71 - 60 + 1

    key = jax.random.PRNGKey(0)
    k_x, k_wih, k_whh, k_bih, k_bhh, k_wfc, k_bfc = jax.random.split(key, 7)

    xs = jax.random.normal(k_x, (B, H_IN), jnp.float32)

    scale = 0.1
    params = (
        scale * jax.random.normal(k_wih, (H, H_IN), jnp.float32),   # weight_ih_l0
        scale * jax.random.normal(k_whh, (H, H), jnp.float32),      # weight_hh_l0
        scale * jax.random.normal(k_bih, (H,), jnp.float32),        # bias_ih_l0
        scale * jax.random.normal(k_bhh, (H,), jnp.float32),        # bias_hh_l0
        scale * jax.random.normal(k_wfc, (N_NOTE_CLASS, H), jnp.float32),  # fc.weight
        scale * jax.random.normal(k_bfc, (N_NOTE_CLASS,), jnp.float32),    # fc.bias
    )

    out = decoder_forward(xs, params, SEQ_LEN, N_NOTE_CLASS)
    out = jax.block_until_ready(out)

    ref = _reference_forward(xs, params, SEQ_LEN, N_NOTE_CLASS)
    assert out.shape == (B * SEQ_LEN, N_NOTE_CLASS), out.shape
    assert jnp.allclose(out, ref, atol=1e-5, rtol=1e-5), "mismatch vs reference"

    print("KERNEL_OK")
</pallas_src>

<mosaic_0001>
module attributes {stable_mosaic.version = 11 : i64} {
  func.func @kernel(%arg0: memref<2x32xf32, #tpu.memory_space<vmem>>, %arg1: memref<32x32xf32, #tpu.memory_space<vmem>>, %arg2: memref<32x32xf32, #tpu.memory_space<vmem>>, %arg3: memref<1x32xf32, #tpu.memory_space<vmem>>, %arg4: memref<32x128xf32, #tpu.memory_space<vmem>>, %arg5: memref<1x128xf32, #tpu.memory_space<vmem>>, %arg6: memref<16x128xf32, #tpu.memory_space<vmem>>, %arg7: memref<16x32xf32, #tpu.memory_space<vmem>>) attributes {dimension_semantics = [], scalar_prefetch = 0 : i64, scratch_operands = 1 : i64, tpu.core_type = #tpu.core_type<tc>} {
    %c0 = arith.constant 0 : index
    %c0_0 = arith.constant 0 : index
    %0 = vector.load %arg0[%c0, %c0_0] : memref<2x32xf32, #tpu.memory_space<vmem>>, vector<2x32xf32>
    %c0_1 = arith.constant 0 : index
    %c0_2 = arith.constant 0 : index
    %1 = vector.load %arg1[%c0_1, %c0_2] : memref<32x32xf32, #tpu.memory_space<vmem>>, vector<32x32xf32>
    %cst = arith.constant dense<0.000000e+00> : vector<2x32xf32>
    %2 = tpu.matmul %0, %1, %cst {dimension_numbers = #tpu.dot_dimension_numbers<[1], [0], [0], [1], [0, 0, 1, 1], [], []>} : vector<2x32xf32>, vector<32x32xf32>, vector<2x32xf32> -> vector<2x32xf32>
    %c0_3 = arith.constant 0 : index
    %c0_4 = arith.constant 0 : index
    %3 = vector.load %arg3[%c0_3, %c0_4] : memref<1x32xf32, #tpu.memory_space<vmem>>, vector<1x32xf32>
    %4 = vector.broadcast %3 : vector<1x32xf32> to vector<2x32xf32>
    %5 = arith.addf %2, %4 : vector<2x32xf32>
    %c0_5 = arith.constant 0 : index
    %c0_6 = arith.constant 0 : index
    %6 = vector.load %arg2[%c0_5, %c0_6] : memref<32x32xf32, #tpu.memory_space<vmem>>, vector<32x32xf32>
    %cst_7 = arith.constant 0.000000e+00 : f32
    %7 = vector.broadcast %cst_7 : f32 to vector<2x32xf32>
    %cst_8 = arith.constant dense<0.000000e+00> : vector<2x32xf32>
    %8 = tpu.matmul %7, %6, %cst_8 {dimension_numbers = #tpu.dot_dimension_numbers<[1], [0], [0], [1], [0, 0, 1, 1], [], []>} : vector<2x32xf32>, vector<32x32xf32>, vector<2x32xf32> -> vector<2x32xf32>
    %9 = arith.addf %5, %8 : vector<2x32xf32>
    %10 = math.tanh %9 : vector<2x32xf32>
    %c0_9 = arith.constant 0 : index
    %c0_10 = arith.constant 0 : index
    %11 = vector.load %arg7[%c0_9, %c0_10] : memref<16x32xf32, #tpu.memory_space<vmem>>, vector<2x32xf32>
    tpu.vector_store %arg7[%c0_9, %c0_10], %10 {strides = array<i32>} : memref<16x32xf32, #tpu.memory_space<vmem>>, vector<2x32xf32>,
    %cst_11 = arith.constant dense<0.000000e+00> : vector<2x32xf32>
    %12 = tpu.matmul %10, %6, %cst_11 {dimension_numbers = #tpu.dot_dimension_numbers<[1], [0], [0], [1], [0, 0, 1, 1], [], []>} : vector<2x32xf32>, vector<32x32xf32>, vector<2x32xf32> -> vector<2x32xf32>
    %13 = arith.addf %5, %12 : vector<2x32xf32>
    %14 = math.tanh %13 : vector<2x32xf32>
    %c2 = arith.constant 2 : index
    %c0_12 = arith.constant 0 : index
    %15 = vector.load %arg7[%c2, %c0_12] : memref<16x32xf32, #tpu.memory_space<vmem>>, vector<2x32xf32>
    tpu.vector_store %arg7[%c2, %c0_12], %14 {strides = array<i32>} : memref<16x32xf32, #tpu.memory_space<vmem>>, vector<2x32xf32>,
    %cst_13 = arith.constant dense<0.000000e+00> : vector<2x32xf32>
    %16 = tpu.matmul %14, %6, %cst_13 {dimension_numbers = #tpu.dot_dimension_numbers<[1], [0], [0], [1], [0, 0, 1, 1], [], []>} : vector<2x32xf32>, vector<32x32xf32>, vector<2x32xf32> -> vector<2x32xf32>
    %17 = arith.addf %5, %16 : vector<2x32xf32>
    %18 = math.tanh %17 : vector<2x32xf32>
    %c4 = arith.constant 4 : index
    %c0_14 = arith.constant 0 : index
    %19 = vector.load %arg7[%c4, %c0_14] : memref<16x32xf32, #tpu.memory_space<vmem>>, vector<2x32xf32>
    tpu.vector_store %arg7[%c4, %c0_14], %18 {strides = array<i32>} : memref<16x32xf32, #tpu.memory_space<vmem>>, vector<2x32xf32>,
    %cst_15 = arith.constant dense<0.000000e+00> : vector<2x32xf32>
    %20 = tpu.matmul %18, %6, %cst_15 {dimension_numbers = #tpu.dot_dimension_numbers<[1], [0], [0], [1], [0, 0, 1, 1], [], []>} : vector<2x32xf32>, vector<32x32xf32>, vector<2x32xf32> -> vector<2x32xf32>
    %21 = arith.addf %5, %20 : vector<2x32xf32>
    %22 = math.tanh %21 : vector<2x32xf32>
    %c6 = arith.constant 6 : index
    %c0_16 = arith.constant 0 : index
    %23 = vector.load %arg7[%c6, %c0_16] : memref<16x32xf32, #tpu.memory_space<vmem>>, vector<2x32xf32>
    tpu.vector_store %arg7[%c6, %c0_16], %22 {strides = array<i32>} : memref<16x32xf32, #tpu.memory_space<vmem>>, vector<2x32xf32>,
    %cst_17 = arith.constant dense<0.000000e+00> : vector<2x32xf32>
    %24 = tpu.matmul %22, %6, %cst_17 {dimension_numbers = #tpu.dot_dimension_numbers<[1], [0], [0], [1], [0, 0, 1, 1], [], []>} : vector<2x32xf32>, vector<32x32xf32>, vector<2x32xf32> -> vector<2x32xf32>
    %25 = arith.addf %5, %24 : vector<2x32xf32>
    %26 = math.tanh %25 : vector<2x32xf32>
    %c8 = arith.constant 8 : index
    %c0_18 = arith.constant 0 : index
    %27 = vector.load %arg7[%c8, %c0_18] : memref<16x32xf32, #tpu.memory_space<vmem>>, vector<2x32xf32>
    tpu.vector_store %arg7[%c8, %c0_18], %26 {strides = array<i32>} : memref<16x32xf32, #tpu.memory_space<vmem>>, vector<2x32xf32>,
    %cst_19 = arith.constant dense<0.000000e+00> : vector<2x32xf32>
    %28 = tpu.matmul %26, %6, %cst_19 {dimension_numbers = #tpu.dot_dimension_numbers<[1], [0], [0], [1], [0, 0, 1, 1], [], []>} : vector<2x32xf32>, vector<32x32xf32>, vector<2x32xf32> -> vector<2x32xf32>
    %29 = arith.addf %5, %28 : vector<2x32xf32>
    %30 = math.tanh %29 : vector<2x32xf32>
    %c10 = arith.constant 10 : index
    %c0_20 = arith.constant 0 : index
    %31 = vector.load %arg7[%c10, %c0_20] : memref<16x32xf32, #tpu.memory_space<vmem>>, vector<2x32xf32>
    tpu.vector_store %arg7[%c10, %c0_20], %30 {strides = array<i32>} : memref<16x32xf32, #tpu.memory_space<vmem>>, vector<2x32xf32>,
    %cst_21 = arith.constant dense<0.000000e+00> : vector<2x32xf32>
    %32 = tpu.matmul %30, %6, %cst_21 {dimension_numbers = #tpu.dot_dimension_numbers<[1], [0], [0], [1], [0, 0, 1, 1], [], []>} : vector<2x32xf32>, vector<32x32xf32>, vector<2x32xf32> -> vector<2x32xf32>
    %33 = arith.addf %5, %32 : vector<2x32xf32>
    %34 = math.tanh %33 : vector<2x32xf32>
    %c12 = arith.constant 12 : index
    %c0_22 = arith.constant 0 : index
    %35 = vector.load %arg7[%c12, %c0_22] : memref<16x32xf32, #tpu.memory_space<vmem>>, vector<2x32xf32>
    tpu.vector_store %arg7[%c12, %c0_22], %34 {strides = array<i32>} : memref<16x32xf32, #tpu.memory_space<vmem>>, vector<2x32xf32>,
    %cst_23 = arith.constant dense<0.000000e+00> : vector<2x32xf32>
    %36 = tpu.matmul %34, %6, %cst_23 {dimension_numbers = #tpu.dot_dimension_numbers<[1], [0], [0], [1], [0, 0, 1, 1], [], []>} : vector<2x32xf32>, vector<32x32xf32>, vector<2x32xf32> -> vector<2x32xf32>
    %37 = arith.addf %5, %36 : vector<2x32xf32>
    %38 = math.tanh %37 : vector<2x32xf32>
    %c14 = arith.constant 14 : index
    %c0_24 = arith.constant 0 : index
    %39 = vector.load %arg7[%c14, %c0_24] : memref<16x32xf32, #tpu.memory_space<vmem>>, vector<2x32xf32>
    tpu.vector_store %arg7[%c14, %c0_24], %38 {strides = array<i32>} : memref<16x32xf32, #tpu.memory_space<vmem>>, vector<2x32xf32>,
    %c0_25 = arith.constant 0 : index
    %c0_26 = arith.constant 0 : index
    %40 = vector.load %arg7[%c0_25, %c0_26] : memref<16x32xf32, #tpu.memory_space<vmem>>, vector<16x32xf32>
    %c0_27 = arith.constant 0 : index
    %c0_28 = arith.constant 0 : index
    %41 = vector.load %arg4[%c0_27, %c0_28] : memref<32x128xf32, #tpu.memory_space<vmem>>, vector<32x128xf32>
    %cst_29 = arith.constant dense<0.000000e+00> : vector<16x128xf32>
    %42 = tpu.matmul %40, %41, %cst_29 {dimension_numbers = #tpu.dot_dimension_numbers<[1], [0], [0], [1], [0, 0, 1, 1], [], []>} : vector<16x32xf32>, vector<32x128xf32>, vector<16x128xf32> -> vector<16x128xf32>
    %c0_30 = arith.constant 0 : index
    %c0_31 = arith.constant 0 : index
    %43 = vector.load %arg5[%c0_30, %c0_31] : memref<1x128xf32, #tpu.memory_space<vmem>>, vector<1x128xf32>
    %44 = vector.broadcast %43 : vector<1x128xf32> to vector<16x128xf32>
    %45 = arith.addf %42, %44 : vector<16x128xf32>
    %c0_32 = arith.constant 0 : index
    %c0_33 = arith.constant 0 : index
    %46 = vector.load %arg6[%c0_32, %c0_33] : memref<16x128xf32, #tpu.memory_space<vmem>>, vector<16x128xf32>
    tpu.vector_store %arg6[%c0_32, %c0_33], %45 {strides = array<i32>} : memref<16x128xf32, #tpu.memory_space<vmem>>, vector<16x128xf32>,
    return
  }
}

</mosaic_0001>

<llo_original>
// kernel: tpu_custom_call.1
$region0: #{tpu_custom_call.1}
  #allocation0 [shape = 'u32[]', space=smem, size = 0x4, offset = 0x4, fixed_abs, tag = 'smem constant byte address 0x4 - core index']
  #allocation1 [shape = 'u32[144,128]{1,0:T(1,128)}', space=vmem, size = 0x12000, scoped, tag = 'internal scratch']
  #allocation2 [shape = 'f32[16,32]{1,0:T(8,128)}', space=vmem, size = 0x2000, scoped, tag = 'scratch operand']
  %s0 = inlined_call_operand.hbm [shape: f32[2,32], index: 0, kind: input, shape index: {}]
  %s1 = inlined_call_operand.hbm [shape: f32[32,32], index: 1, kind: input, shape index: {}]
  %s2 = inlined_call_operand.hbm [shape: f32[32,32], index: 2, kind: input, shape index: {}]
  %s3 = inlined_call_operand.vmem [shape: f32[1,32], index: 3, kind: input, shape index: {}]
  %s4 = inlined_call_operand.hbm [shape: f32[32,128], index: 4, kind: input, shape index: {}]
  %s5 = inlined_call_operand.vmem [shape: f32[1,128], index: 5, kind: input, shape index: {}]
  %s6 = inlined_call_operand.hbm [shape: f32[16,128], index: 6, kind: output, shape index: {}]
  %s7 = sld [smem:[#allocation0]]
  $region50: #{tpu_custom_call.1} parent=0
    _
  %s9 = ssub.s32 1, %s7
  %s10 = scalar_select 0, %s9, %s7
  $region1: #{tpu_custom_call.1} parent=0
    #allocation3 [shape = 'u8[1024]{0}', space=vmem, size = 0x400, scoped, tag = 'input window, operand 0, single buffered']
    #allocation4 [shape = 's32[1]{0}', space=sflag, size = 0x4, scoped, tag = 'scoped memory for tpu_custom_call.1']
    #allocation5 [shape = 's32[1]{0}', space=sflag, size = 0x4, scoped, tag = 'scoped memory for tpu_custom_call.1']
    #allocation6 [shape = 'u8[16384]{0}', space=vmem, size = 0x4000, scoped, tag = 'input window, operand 1, single buffered']
    #allocation7 [shape = 's32[1]{0}', space=sflag, size = 0x4, scoped, tag = 'scoped memory for tpu_custom_call.1']
    #allocation8 [shape = 'u8[16384]{0}', space=vmem, size = 0x4000, scoped, tag = 'input window, operand 2, single buffered']
    #allocation9 [shape = 'u8[16384]{0}', space=vmem, size = 0x4000, scoped, tag = 'input window, operand 4, single buffered']
    #allocation10 [shape = 's32[1]{0}', space=sflag, size = 0x4, scoped, tag = 'scoped memory for tpu_custom_call.1']
    #allocation11 [shape = 'u8[8192]{0}', space=vmem, size = 0x2000, scoped, tag = 'output window, operand 0, single buffered']
    %11 = vsyncpa [#allocation4], 0
    %12 = vsyncpa [#allocation7], 0
    %13 = vsyncpa [#allocation10], 0
    %14 = vsyncpa [#allocation5], 0
    // Predicated region
    $region2: #{tpu_custom_call.1} parent=1 // pred_check
      _
    $region3: #{tpu_custom_call.1} parent=1 // pred_check_branch
      %16 = sbr.rel (0) target = $region5
    $region4: #{tpu_custom_call.1} parent=1 // pred_region
      %s18 = ssub.s32 32, 32
      %19 = vsyncadd [#allocation4], %s18
      %s21 = sshll.u32 [#allocation3], 4
      %s22 = int_to_ptr.vmem [resolvable:$true] %s21
      %24 = dma.hbm_to_vmem [thread:$0]  %s0, 32, %s22, [#allocation4]
    $region5: #{tpu_custom_call.1} parent=1 // pred_fallthru
      _
    // Predicated region
    $region6: #{tpu_custom_call.1} parent=1 // pred_check
      _
    $region7: #{tpu_custom_call.1} parent=1 // pred_check_branch
      %26 = sbr.rel (0) target = $region9
    $region8: #{tpu_custom_call.1} parent=1 // pred_region
      %s28 = ssub.s32 512, 512
      %29 = vsyncadd [#allocation7], %s28
      %s30 = sshll.u32 [#allocation6], 4
      %s31 = int_to_ptr.vmem [resolvable:$true] %s30
      %36 = dma.hbm_to_vmem [thread:$0]  %s1, 512, %s31, [#allocation7], 128, 128, 8
    $region9: #{tpu_custom_call.1} parent=1 // pred_fallthru
      _
    // Predicated region
    $region10: #{tpu_custom_call.1} parent=1 // pred_check
      _
    $region11: #{tpu_custom_call.1} parent=1 // pred_check_branch
      %38 = sbr.rel (0) target = $region13
    $region12: #{tpu_custom_call.1} parent=1 // pred_region
      %s40 = ssub.s32 512, 512
      %41 = vsyncadd [#allocation7], %s40
      %s42 = sshll.u32 [#allocation8], 4
      %s43 = int_to_ptr.vmem [resolvable:$true] %s42
      %48 = dma.hbm_to_vmem [thread:$0]  %s2, 512, %s43, [#allocation7], 128, 128, 8
    $region13: #{tpu_custom_call.1} parent=1 // pred_fallthru
      _
    // Predicated region
    $region14: #{tpu_custom_call.1} parent=1 // pred_check
      _
    $region15: #{tpu_custom_call.1} parent=1 // pred_check_branch
      %50 = sbr.rel (0) target = $region17
    $region16: #{tpu_custom_call.1} parent=1 // pred_region
      _
    $region17: #{tpu_custom_call.1} parent=1 // pred_fallthru
      _
    // Predicated region
    $region18: #{tpu_custom_call.1} parent=1 // pred_check
      _
    $region19: #{tpu_custom_call.1} parent=1 // pred_check_branch
      %52 = sbr.rel (0) target = $region21
    $region20: #{tpu_custom_call.1} parent=1 // pred_region
      %s54 = ssub.s32 512, 512
      %55 = vsyncadd [#allocation10], %s54
      %s56 = sshll.u32 [#allocation9], 4
      %s57 = int_to_ptr.vmem [resolvable:$true] %s56
      %62 = dma.hbm_to_vmem [thread:$0]  %s4, 512, %s57, [#allocation10], 128, 128, 8
    $region21: #{tpu_custom_call.1} parent=1 // pred_fallthru
      _
    // Predicated region
    $region22: #{tpu_custom_call.1} parent=1 // pred_check
      _
    $region23: #{tpu_custom_call.1} parent=1 // pred_check_branch
      %64 = sbr.rel (0) target = $region25
    $region24: #{tpu_custom_call.1} parent=1 // pred_region
      _
    $region25: #{tpu_custom_call.1} parent=1 // pred_fallthru
      _
    // Predicated region
    $region26: #{tpu_custom_call.1} parent=1 // pred_check
      _
    $region27: #{tpu_custom_call.1} parent=1 // pred_check_branch
      %66 = sbr.rel (0) target = $region29
    $region28: #{tpu_custom_call.1} parent=1 // pred_region
      %67 = dma.done [#allocation4], 32
    $region29: #{tpu_custom_call.1} parent=1 // pred_fallthru
      _
    // Predicated region
    $region30: #{tpu_custom_call.1} parent=1 // pred_check
      _
    $region31: #{tpu_custom_call.1} parent=1 // pred_check_branch
      %69 = sbr.rel (0) target = $region33
    $region32: #{tpu_custom_call.1} parent=1 // pred_region
      %70 = dma.done [#allocation7], 512
    $region33: #{tpu_custom_call.1} parent=1 // pred_fallthru
      _
    // Predicated region
    $region34: #{tpu_custom_call.1} parent=1 // pred_check
      _
    $region35: #{tpu_custom_call.1} parent=1 // pred_check_branch
      %72 = sbr.rel (0) target = $region37
    $region36: #{tpu_custom_call.1} parent=1 // pred_region
      %73 = dma.done [#allocation7], 512
    $region37: #{tpu_custom_call.1} parent=1 // pred_fallthru
      _
    // Predicated region
    $region38: #{tpu_custom_call.1} parent=1 // pred_check
      _
    $region39: #{tpu_custom_call.1} parent=1 // pred_check_branch
      %75 = sbr.rel (0) target = $region41
    $region40: #{tpu_custom_call.1} parent=1 // pred_region
      %76 = dma.done [#allocation10], 512
    $region41: #{tpu_custom_call.1} parent=1 // pred_fallthru
      _
    %v77 = vld [vmem:[#allocation3] sm:$0x3]
    %v78 = vld [vmem:[#allocation6] sm:$0xff]
    %v79 = vld [vmem:[#allocation6 + $0x8] sm:$0xff]
    %v80 = vld [vmem:[#allocation6 + $0x10] sm:$0xff]
    %v81 = vld [vmem:[#allocation6 + $0x18] sm:$0xff]
    %v82 = vld [vmem:[%s3] sm:$0x1]
    %v84 = vlaneseq
    %v85 = vshrl.u32 %v84, 7
    %v86 = vsub.s32 0, %v85
    %v87 = vrot.slane %v82, %v86
    %vm89 = vcmask 261120
    %v91 = vsel %vm89, %v77, 0
    %93 = vmatprep.subr.mxu0 0.0
    %94 = vmatpush1.msra.mxu0 0.0
    %95 = vmatprep.subr.mxu0 0.0
    %96 = vmatpush1.msra.mxu0 0.0
    %97 = vmatprep.subr.mxu0 0.0
    %98 = vmatpush1.msra.mxu0 0.0
    %99 = vmatprep.subr.mxu0 0.0
    %100 = vmatpush1.msra.mxu0 0.0
    %101 = vmatprep.subr.mxu0 0.0
    %102 = vmatpush1.msra.mxu0 0.0
    %103 = vmatprep.subr.mxu0 0.0
    %104 = vmatpush1.msra.mxu0 0.0
    %105 = vmatprep.subr.mxu0 0.0
    %106 = vmatpush1.msra.mxu0 0.0
    %107 = vmatprep.subr.mxu0 0.0
    %108 = vmatpush1.msra.mxu0 0.0
    %109 = vmatprep.subr.mxu0 0.0
    %110 = vmatpush1.msra.mxu0 0.0
    %111 = vmatprep.subr.mxu0 0.0
    %112 = vmatpush1.msra.mxu0 0.0
    %113 = vmatprep.subr.mxu0 0.0
    %114 = vmatpush1.msra.mxu0 0.0
    %115 = vmatprep.subr.mxu0 0.0
    %116 = vmatpush1.msra.mxu0 0.0
    %117 = vmatprep.subr.mxu0 0.0
    %118 = vmatpush1.msra.mxu0 %v81
    %119 = vmatprep.subr.mxu0 0.0
    %120 = vmatpush1.msra.mxu0 %v80
    %121 = vmatprep.subr.mxu0 0.0
    %122 = vmatpush1.msra.mxu0 %v79
    %123 = vmatprep.subr.mxu0 0.0
    %124 = vmatpush1.msra.mxu0 %v78
    %125 = vmatprep.subr.mxu0 0.0
    %126 = vmatpush2.msra.mxu0 0.0
    %127 = vmatprep.subr.mxu0 0.0
    %128 = vmatpush2.msra.mxu0 0.0
    %129 = vmatprep.subr.mxu0 0.0
    %130 = vmatpush2.msra.mxu0 0.0
    %131 = vmatprep.subr.mxu0 0.0
    %132 = vmatpush2.msra.mxu0 0.0
    %133 = vmatprep.subr.mxu0 0.0
    %134 = vmatpush2.msra.mxu0 0.0
    %135 = vmatprep.subr.mxu0 0.0
    %136 = vmatpush2.msra.mxu0 0.0
    %137 = vmatprep.subr.mxu0 0.0
    %138 = vmatpush2.msra.mxu0 0.0
    %139 = vmatprep.subr.mxu0 0.0
    %140 = vmatpush2.msra.mxu0 0.0
    %141 = vmatprep.subr.mxu0 0.0
    %142 = vmatpush2.msra.mxu0 0.0
    %143 = vmatprep.subr.mxu0 0.0
    %144 = vmatpush2.msra.mxu0 0.0
    %145 = vmatprep.subr.mxu0 0.0
    %146 = vmatpush2.msra.mxu0 0.0
    %147 = vmatprep.subr.mxu0 0.0
    %148 = vmatpush2.msra.mxu0 0.0
    %149 = vmatprep.subr.mxu0 0.0
    %150 = vmatpush2.msra.mxu0 0.0
    %151 = vmatprep.subr.mxu0 0.0
    %152 = vmatpush2.msra.mxu0 0.0
    %153 = vmatprep.subr.mxu0 0.0
    %154 = vmatpush2.msra.mxu0 0.0
    %155 = vmatprep.subr.mxu0 0.0
    %156 = vmatpush2.msra.mxu0 0.0
    %157 = vmatprep.mubr.f32.mxu0 0.0
    %158 = vmatmul.mubr.f32.gmra.mxu0 %v91
    %v159 = vpop.f32.mrf.mxu0
    %v160 = vadd.f32 %v87, %v159
    %v161 = vpop.f32.mrf.mxu0
    %162 = vdwg.mxu0
    %v163 = vld [vmem:[#allocation8] sm:$0xff]
    %v164 = vld [vmem:[#allocation8 + $0x8] sm:$0xff]
    %v165 = vld [vmem:[#allocation8 + $0x10] sm:$0xff]
    %v166 = vld [vmem:[#allocation8 + $0x18] sm:$0xff]
    %v168 = vsel %vm89, 0.0, 0
    %170 = vmatprep.subr.mxu0 0.0
    %171 = vmatpush1.msra.mxu0 0.0
    %172 = vmatprep.subr.mxu0 0.0
    %173 = vmatpush1.msra.mxu0 0.0
    %174 = vmatprep.subr.mxu0 0.0
    %175 = vmatpush1.msra.mxu0 0.0
    %176 = vmatprep.subr.mxu0 0.0
    %177 = vmatpush1.msra.mxu0 0.0
    %178 = vmatprep.subr.mxu0 0.0
    %179 = vmatpush1.msra.mxu0 0.0
    %180 = vmatprep.subr.mxu0 0.0
    %181 = vmatpush1.msra.mxu0 0.0
    %182 = vmatprep.subr.mxu0 0.0
    %183 = vmatpush1.msra.mxu0 0.0
    %184 = vmatprep.subr.mxu0 0.0
    %185 = vmatpush1.msra.mxu0 0.0
    %186 = vmatprep.subr.mxu0 0.0
    %187 = vmatpush1.msra.mxu0 0.0
    %188 = vmatprep.subr.mxu0 0.0
    %189 = vmatpush1.msra.mxu0 0.0
    %190 = vmatprep.subr.mxu0 0.0
    %191 = vmatpush1.msra.mxu0 0.0
    %192 = vmatprep.subr.mxu0 0.0
    %193 = vmatpush1.msra.mxu0 0.0
    %194 = vmatprep.subr.mxu0 0.0
    %195 = vmatpush1.msra.mxu0 %v166
    %196 = vmatprep.subr.mxu0 0.0
    %197 = vmatpush1.msra.mxu0 %v165
    %198 = vmatprep.subr.mxu0 0.0
    %199 = vmatpush1.msra.mxu0 %v164
    %200 = vmatprep.subr.mxu0 0.0
    %201 = vmatpush1.msra.mxu0 %v163
    %202 = vmatprep.subr.mxu0 0.0
    %203 = vmatpush2.msra.mxu0 0.0
    %204 = vmatprep.subr.mxu0 0.0
    %205 = vmatpush2.msra.mxu0 0.0
    %206 = vmatprep.subr.mxu0 0.0
    %207 = vmatpush2.msra.mxu0 0.0
    %208 = vmatprep.subr.mxu0 0.0
    %209 = vmatpush2.msra.mxu0 0.0
    %210 = vmatprep.subr.mxu0 0.0
    %211 = vmatpush2.msra.mxu0 0.0
    %212 = vmatprep.subr.mxu0 0.0
    %213 = vmatpush2.msra.mxu0 0.0
    %214 = vmatprep.subr.mxu0 0.0
    %215 = vmatpush2.msra.mxu0 0.0
    %216 = vmatprep.subr.mxu0 0.0
    %217 = vmatpush2.msra.mxu0 0.0
    %218 = vmatprep.subr.mxu0 0.0
    %219 = vmatpush2.msra.mxu0 0.0
    %220 = vmatprep.subr.mxu0 0.0
    %221 = vmatpush2.msra.mxu0 0.0
    %222 = vmatprep.subr.mxu0 0.0
    %223 = vmatpush2.msra.mxu0 0.0
    %224 = vmatprep.subr.mxu0 0.0
    %225 = vmatpush2.msra.mxu0 0.0
    %226 = vmatprep.subr.mxu0 0.0
    %227 = vmatpush2.msra.mxu0 0.0
    %228 = vmatprep.subr.mxu0 0.0
    %229 = vmatpush2.msra.mxu0 0.0
    %230 = vmatprep.subr.mxu0 0.0
    %231 = vmatpush2.msra.mxu0 0.0
    %232 = vmatprep.subr.mxu0 0.0
    %233 = vmatpush2.msra.mxu0 0.0
    %234 = vmatprep.mubr.f32.mxu0 0.0
    %235 = vmatmul.mubr.f32.gmra.mxu0 %v168
    %v236 = vpop.f32.mrf.mxu0
    %v237 = vadd.f32 0.0, %v236
    %v238 = vpop.f32.mrf.mxu0
    %239 = vdwg.mxu0
    %v240 = vadd.f32 %v160, %v237
    %v241 = vtanh.pop %v240
    %vm242 = vcmask 254976
    %243 = vst.msk [vmem:[#allocation2] sm:$0x3] %vm242, %v241
    %v245 = vsel %vm89, %v241, 0
    %247 = vmatprep.subr.mxu0 0.0
    %248 = vmatpush1.msra.mxu0 0.0
    %249 = vmatprep.subr.mxu0 0.0
    %250 = vmatpush1.msra.mxu0 0.0
    %251 = vmatprep.subr.mxu0 0.0
    %252 = vmatpush1.msra.mxu0 0.0
    %253 = vmatprep.subr.mxu0 0.0
    %254 = vmatpush1.msra.mxu0 0.0
    %255 = vmatprep.subr.mxu0 0.0
    %256 = vmatpush1.msra.mxu0 0.0
    %257 = vmatprep.subr.mxu0 0.0
    %258 = vmatpush1.msra.mxu0 0.0
    %259 = vmatprep.subr.mxu0 0.0
    %260 = vmatpush1.msra.mxu0 0.0
    %261 = vmatprep.subr.mxu0 0.0
    %262 = vmatpush1.msra.mxu0 0.0
    %263 = vmatprep.subr.mxu0 0.0
    %264 = vmatpush1.msra.mxu0 0.0
    %265 = vmatprep.subr.mxu0 0.0
    %266 = vmatpush1.msra.mxu0 0.0
    %267 = vmatprep.subr.mxu0 0.0
    %268 = vmatpush1.msra.mxu0 0.0
    %269 = vmatprep.subr.mxu0 0.0
    %270 = vmatpush1.msra.mxu0 0.0
    %271 = vmatprep.subr.mxu0 0.0
    %272 = vmatpush1.msra.mxu0 %v166
    %273 = vmatprep.subr.mxu0 0.0
    %274 = vmatpush1.msra.mxu0 %v165
    %275 = vmatprep.subr.mxu0 0.0
    %276 = vmatpush1.msra.mxu0 %v164
    %277 = vmatprep.subr.mxu0 0.0
    %278 = vmatpush1.msra.mxu0 %v163
    %279 = vmatprep.subr.mxu0 0.0
    %280 = vmatpush2.msra.mxu0 0.0
    %281 = vmatprep.subr.mxu0 0.0
    %282 = vmatpush2.msra.mxu0 0.0
    %283 = vmatprep.subr.mxu0 0.0
    %284 = vmatpush2.msra.mxu0 0.0
    %285 = vmatprep.subr.mxu0 0.0
    %286 = vmatpush2.msra.mxu0 0.0
    %287 = vmatprep.subr.mxu0 0.0
    %288 = vmatpush2.msra.mxu0 0.0
    %289 = vmatprep.subr.mxu0 0.0
    %290 = vmatpush2.msra.mxu0 0.0
    %291 = vmatprep.subr.mxu0 0.0
    %292 = vmatpush2.msra.mxu0 0.0
    %293 = vmatprep.subr.mxu0 0.0
    %294 = vmatpush2.msra.mxu0 0.0
    %295 = vmatprep.subr.mxu0 0.0
    %296 = vmatpush2.msra.mxu0 0.0
    %297 = vmatprep.subr.mxu0 0.0
    %298 = vmatpush2.msra.mxu0 0.0
    %299 = vmatprep.subr.mxu0 0.0
    %300 = vmatpush2.msra.mxu0 0.0
    %301 = vmatprep.subr.mxu0 0.0
    %302 = vmatpush2.msra.mxu0 0.0
    %303 = vmatprep.subr.mxu0 0.0
    %304 = vmatpush2.msra.mxu0 0.0
    %305 = vmatprep.subr.mxu0 0.0
    %306 = vmatpush2.msra.mxu0 0.0
    %307 = vmatprep.subr.mxu0 0.0
    %308 = vmatpush2.msra.mxu0 0.0
    %309 = vmatprep.subr.mxu0 0.0
    %310 = vmatpush2.msra.mxu0 0.0
    %311 = vmatprep.mubr.f32.mxu0 0.0
    %312 = vmatmul.mubr.f32.gmra.mxu0 %v245
    %v313 = vpop.f32.mrf.mxu0
    %v314 = vadd.f32 0.0, %v313
    %v315 = vpop.f32.mrf.mxu0
    %316 = vdwg.mxu0
    %v317 = vadd.f32 %v160, %v314
    %v318 = vtanh.pop %v317
    %319 = vst.msk [vmem:[#allocation2 + $0x2] sm:$0x3] %vm242, %v318
    %v321 = vsel %vm89, %v318, 0
    %323 = vmatprep.subr.mxu0 0.0
    %324 = vmatpush1.msra.mxu0 0.0
    %325 = vmatprep.subr.mxu0 0.0
    %326 = vmatpush1.msra.mxu0 0.0
    %327 = vmatprep.subr.mxu0 0.0
    %328 = vmatpush1.msra.mxu0 0.0
    %329 = vmatprep.subr.mxu0 0.0
    %330 = vmatpush1.msra.mxu0 0.0
    %331 = vmatprep.subr.mxu0 0.0
    %332 = vmatpush1.msra.mxu0 0.0
    %333 = vmatprep.subr.mxu0 0.0
    %334 = vmatpush1.msra.mxu0 0.0
    %335 = vmatprep.subr.mxu0 0.0
    %336 = vmatpush1.msra.mxu0 0.0
    %337 = vmatprep.subr.mxu0 0.0
    %338 = vmatpush1.msra.mxu0 0.0
    %339 = vmatprep.subr.mxu0 0.0
    %340 = vmatpush1.msra.mxu0 0.0
    %341 = vmatprep.subr.mxu0 0.0
    %342 = vmatpush1.msra.mxu0 0.0
    %343 = vmatprep.subr.mxu0 0.0
    %344 = vmatpush1.msra.mxu0 0.0
    %345 = vmatprep.subr.mxu0 0.0
    %346 = vmatpush1.msra.mxu0 0.0
    %347 = vmatprep.subr.mxu0 0.0
    %348 = vmatpush1.msra.mxu0 %v166
    %349 = vmatprep.subr.mxu0 0.0
    %350 = vmatpush1.msra.mxu0 %v165
    %351 = vmatprep.subr.mxu0 0.0
    %352 = vmatpush1.msra.mxu0 %v164
    %353 = vmatprep.subr.mxu0 0.0
    %354 = vmatpush1.msra.mxu0 %v163
    %355 = vmatprep.subr.mxu0 0.0
    %356 = vmatpush2.msra.mxu0 0.0
    %357 = vmatprep.subr.mxu0 0.0
    %358 = vmatpush2.msra.mxu0 0.0
    %359 = vmatprep.subr.mxu0 0.0
    %360 = vmatpush2.msra.mxu0 0.0
    %361 = vmatprep.subr.mxu0 0.0
    %362 = vmatpush2.msra.mxu0 0.0
    %363 = vmatprep.subr.mxu0 0.0
    %364 = vmatpush2.msra.mxu0 0.0
    %365 = vmatprep.subr.mxu0 0.0
    %366 = vmatpush2.msra.mxu0 0.0
    %367 = vmatprep.subr.mxu0 0.0
    %368 = vmatpush2.msra.mxu0 0.0
    %369 = vmatprep.subr.mxu0 0.0
    %370 = vmatpush2.msra.mxu0 0.0
    %371 = vmatprep.subr.mxu0 0.0
    %372 = vmatpush2.msra.mxu0 0.0
    %373 = vmatprep.subr.mxu0 0.0
    %374 = vmatpush2.msra.mxu0 0.0
    %375 = vmatprep.subr.mxu0 0.0
    %376 = vmatpush2.msra.mxu0 0.0
    %377 = vmatprep.subr.mxu0 0.0
    %378 = vmatpush2.msra.mxu0 0.0
    %379 = vmatprep.subr.mxu0 0.0
    %380 = vmatpush2.msra.mxu0 0.0
    %381 = vmatprep.subr.mxu0 0.0
    %382 = vmatpush2.msra.mxu0 0.0
    %383 = vmatprep.subr.mxu0 0.0
    %384 = vmatpush2.msra.mxu0 0.0
    %385 = vmatprep.subr.mxu0 0.0
    %386 = vmatpush2.msra.mxu0 0.0
    %387 = vmatprep.mubr.f32.mxu0 0.0
    %388 = vmatmul.mubr.f32.gmra.mxu0 %v321
    %v389 = vpop.f32.mrf.mxu0
    %v390 = vadd.f32 0.0, %v389
    %v391 = vpop.f32.mrf.mxu0
    %392 = vdwg.mxu0
    %v393 = vadd.f32 %v160, %v390
    %v394 = vtanh.pop %v393
    %395 = vst.msk [vmem:[#allocation2 + $0x4] sm:$0x3] %vm242, %v394
    %v397 = vsel %vm89, %v394, 0
    %399 = vmatprep.subr.mxu0 0.0
    %400 = vmatpush1.msra.mxu0 0.0
    %401 = vmatprep.subr.mxu0 0.0
    %402 = vmatpush1.msra.mxu0 0.0
    %403 = vmatprep.subr.mxu0 0.0
    %404 = vmatpush1.msra.mxu0 0.0
    %405 = vmatprep.subr.mxu0 0.0
    %406 = vmatpush1.msra.mxu0 0.0
    %407 = vmatprep.subr.mxu0 0.0
    %408 = vmatpush1.msra.mxu0 0.0
    %409 = vmatprep.subr.mxu0 0.0
    %410 = vmatpush1.msra.mxu0 0.0
    %411 = vmatprep.subr.mxu0 0.0
    %412 = vmatpush1.msra.mxu0 0.0
    %413 = vmatprep.subr.mxu0 0.0
    %414 = vmatpush1.msra.mxu0 0.0
    %415 = vmatprep.subr.mxu0 0.0
    %416 = vmatpush1.msra.mxu0 0.0
    %417 = vmatprep.subr.mxu0 0.0
    %418 = vmatpush1.msra.mxu0 0.0
    %419 = vmatprep.subr.mxu0 0.0
    %420 = vmatpush1.msra.mxu0 0.0
    %421 = vmatprep.subr.mxu0 0.0
    %422 = vmatpush1.msra.mxu0 0.0
    %423 = vmatprep.subr.mxu0 0.0
    %424 = vmatpush1.msra.mxu0 %v166
    %425 = vmatprep.subr.mxu0 0.0
    %426 = vmatpush1.msra.mxu0 %v165
    %427 = vmatprep.subr.mxu0 0.0
    %428 = vmatpush1.msra.mxu0 %v164
    %429 = vmatprep.subr.mxu0 0.0
    %430 = vmatpush1.msra.mxu0 %v163
    %431 = vmatprep.subr.mxu0 0.0
    %432 = vmatpush2.msra.mxu0 0.0
    %433 = vmatprep.subr.mxu0 0.0
    %434 = vmatpush2.msra.mxu0 0.0
    %435 = vmatprep.subr.mxu0 0.0
    %436 = vmatpush2.msra.mxu0 0.0
    %437 = vmatprep.subr.mxu0 0.0
    %438 = vmatpush2.msra.mxu0 0.0
    %439 = vmatprep.subr.mxu0 0.0
    %440 = vmatpush2.msra.mxu0 0.0
    %441 = vmatprep.subr.mxu0 0.0
    %442 = vmatpush2.msra.mxu0 0.0
    %443 = vmatprep.subr.mxu0 0.0
    %444 = vmatpush2.msra.mxu0 0.0
    %445 = vmatprep.subr.mxu0 0.0
    %446 = vmatpush2.msra.mxu0 0.0
    %447 = vmatprep.subr.mxu0 0.0
    %448 = vmatpush2.msra.mxu0 0.0
    %449 = vmatprep.subr.mxu0 0.0
    %450 = vmatpush2.msra.mxu0 0.0
    %451 = vmatprep.subr.mxu0 0.0
    %452 = vmatpush2.msra.mxu0 0.0
    %453 = vmatprep.subr.mxu0 0.0
    %454 = vmatpush2.msra.mxu0 0.0
    %455 = vmatprep.subr.mxu0 0.0
    %456 = vmatpush2.msra.mxu0 0.0
    %457 = vmatprep.subr.mxu0 0.0
    %458 = vmatpush2.msra.mxu0 0.0
    %459 = vmatprep.subr.mxu0 0.0
    %460 = vmatpush2.msra.mxu0 0.0
    %461 = vmatprep.subr.mxu0 0.0
    %462 = vmatpush2.msra.mxu0 0.0
    %463 = vmatprep.mubr.f32.mxu0 0.0
    %464 = vmatmul.mubr.f32.gmra.mxu0 %v397
    %v465 = vpop.f32.mrf.mxu0
    %v466 = vadd.f32 0.0, %v465
    %v467 = vpop.f32.mrf.mxu0
    %468 = vdwg.mxu0
    %v469 = vadd.f32 %v160, %v466
    %v470 = vtanh.pop %v469
    %471 = vst.msk [vmem:[#allocation2 + $0x6] sm:$0x3] %vm242, %v470
    %v473 = vsel %vm89, %v470, 0
    %475 = vmatprep.subr.mxu0 0.0
    %476 = vmatpush1.msra.mxu0 0.0
    %477 = vmatprep.subr.mxu0 0.0
    %478 = vmatpush1.msra.mxu0 0.0
    %479 = vmatprep.subr.mxu0 0.0
    %480 = vmatpush1.msra.mxu0 0.0
    %481 = vmatprep.subr.mxu0 0.0
    %482 = vmatpush1.msra.mxu0 0.0
    %483 = vmatprep.subr.mxu0 0.0
    %484 = vmatpush1.msra.mxu0 0.0
    %485 = vmatprep.subr.mxu0 0.0
    %486 = vmatpush1.msra.mxu0 0.0
    %487 = vmatprep.subr.mxu0 0.0
    %488 = vmatpush1.msra.mxu0 0.0
    %489 = vmatprep.subr.mxu0 0.0
    %490 = vmatpush1.msra.mxu0 0.0
    %491 = vmatprep.subr.mxu0 0.0
    %492 = vmatpush1.msra.mxu0 0.0
    %493 = vmatprep.subr.mxu0 0.0
    %494 = vmatpush1.msra.mxu0 0.0
    %495 = vmatprep.subr.mxu0 0.0
    %496 = vmatpush1.msra.mxu0 0.0
    %497 = vmatprep.subr.mxu0 0.0
    %498 = vmatpush1.msra.mxu0 0.0
    %499 = vmatprep.subr.mxu0 0.0
    %500 = vmatpush1.msra.mxu0 %v166
    %501 = vmatprep.subr.mxu0 0.0
    %502 = vmatpush1.msra.mxu0 %v165
    %503 = vmatprep.subr.mxu0 0.0
    %504 = vmatpush1.msra.mxu0 %v164
    %505 = vmatprep.subr.mxu0 0.0
    %506 = vmatpush1.msra.mxu0 %v163
    %507 = vmatprep.subr.mxu0 0.0
    %508 = vmatpush2.msra.mxu0 0.0
    %509 = vmatprep.subr.mxu0 0.0
    %510 = vmatpush2.msra.mxu0 0.0
    %511 = vmatprep.subr.mxu0 0.0
    %512 = vmatpush2.msra.mxu0 0.0
    %513 = vmatprep.subr.mxu0 0.0
    %514 = vmatpush2.msra.mxu0 0.0
    %515 = vmatprep.subr.mxu0 0.0
    %516 = vmatpush2.msra.mxu0 0.0
    %517 = vmatprep.subr.mxu0 0.0
    %518 = vmatpush2.msra.mxu0 0.0
    %519 = vmatprep.subr.mxu0 0.0
    %520 = vmatpush2.msra.mxu0 0.0
    %521 = vmatprep.subr.mxu0 0.0
    %522 = vmatpush2.msra.mxu0 0.0
    %523 = vmatprep.subr.mxu0 0.0
    %524 = vmatpush2.msra.mxu0 0.0
    %525 = vmatprep.subr.mxu0 0.0
    %526 = vmatpush2.msra.mxu0 0.0
    %527 = vmatprep.subr.mxu0 0.0
    %528 = vmatpush2.msra.mxu0 0.0
    %529 = vmatprep.subr.mxu0 0.0
    %530 = vmatpush2.msra.mxu0 0.0
    %531 = vmatprep.subr.mxu0 0.0
    %532 = vmatpush2.msra.mxu0 0.0
    %533 = vmatprep.subr.mxu0 0.0
    %534 = vmatpush2.msra.mxu0 0.0
    %535 = vmatprep.subr.mxu0 0.0
    %536 = vmatpush2.msra.mxu0 0.0
    %537 = vmatprep.subr.mxu0 0.0
    %538 = vmatpush2.msra.mxu0 0.0
    %539 = vmatprep.mubr.f32.mxu0 0.0
    %540 = vmatmul.mubr.f32.gmra.mxu0 %v473
    %v541 = vpop.f32.mrf.mxu0
    %v542 = vadd.f32 0.0, %v541
    %v543 = vpop.f32.mrf.mxu0
    %544 = vdwg.mxu0
    %v545 = vadd.f32 %v160, %v542
    %v546 = vtanh.pop %v545
    %547 = vst.msk [vmem:[#allocation2 + $0x8] sm:$0x3] %vm242, %v546
    %v549 = vsel %vm89, %v546, 0
    %551 = vmatprep.subr.mxu0 0.0
    %552 = vmatpush1.msra.mxu0 0.0
    %553 = vmatprep.subr.mxu0 0.0
    %554 = vmatpush1.msra.mxu0 0.0
    %555 = vmatprep.subr.mxu0 0.0
    %556 = vmatpush1.msra.mxu0 0.0
    %557 = vmatprep.subr.mxu0 0.0
    %558 = vmatpush1.msra.mxu0 0.0
    %559 = vmatprep.subr.mxu0 0.0
    %560 = vmatpush1.msra.mxu0 0.0
    %561 = vmatprep.subr.mxu0 0.0
    %562 = vmatpush1.msra.mxu0 0.0
    %563 = vmatprep.subr.mxu0 0.0
    %564 = vmatpush1.msra.mxu0 0.0
    %565 = vmatprep.subr.mxu0 0.0
    %566 = vmatpush1.msra.mxu0 0.0
    %567 = vmatprep.subr.mxu0 0.0
    %568 = vmatpush1.msra.mxu0 0.0
    %569 = vmatprep.subr.mxu0 0.0
    %570 = vmatpush1.msra.mxu0 0.0
    %571 = vmatprep.subr.mxu0 0.0
    %572 = vmatpush1.msra.mxu0 0.0
    %573 = vmatprep.subr.mxu0 0.0
    %574 = vmatpush1.msra.mxu0 0.0
    %575 = vmatprep.subr.mxu0 0.0
    %576 = vmatpush1.msra.mxu0 %v166
    %577 = vmatprep.subr.mxu0 0.0
    %578 = vmatpush1.msra.mxu0 %v165
    %579 = vmatprep.subr.mxu0 0.0
    %580 = vmatpush1.msra.mxu0 %v164
    %581 = vmatprep.subr.mxu0 0.0
    %582 = vmatpush1.msra.mxu0 %v163
    %583 = vmatprep.subr.mxu0 0.0
    %584 = vmatpush2.msra.mxu0 0.0
    %585 = vmatprep.subr.mxu0 0.0
    %586 = vmatpush2.msra.mxu0 0.0
    %587 = vmatprep.subr.mxu0 0.0
    %588 = vmatpush2.msra.mxu0 0.0
    %589 = vmatprep.subr.mxu0 0.0
    %590 = vmatpush2.msra.mxu0 0.0
    %591 = vmatprep.subr.mxu0 0.0
    %592 = vmatpush2.msra.mxu0 0.0
    %593 = vmatprep.subr.mxu0 0.0
    %594 = vmatpush2.msra.mxu0 0.0
    %595 = vmatprep.subr.mxu0 0.0
    %596 = vmatpush2.msra.mxu0 0.0
    %597 = vmatprep.subr.mxu0 0.0
    %598 = vmatpush2.msra.mxu0 0.0
    %599 = vmatprep.subr.mxu0 0.0
    %600 = vmatpush2.msra.mxu0 0.0
    %601 = vmatprep.subr.mxu0 0.0
    %602 = vmatpush2.msra.mxu0 0.0
    %603 = vmatprep.subr.mxu0 0.0
    %604 = vmatpush2.msra.mxu0 0.0
    %605 = vmatprep.subr.mxu0 0.0
    %606 = vmatpush2.msra.mxu0 0.0
    %607 = vmatprep.subr.mxu0 0.0
    %608 = vmatpush2.msra.mxu0 0.0
    %609 = vmatprep.subr.mxu0 0.0
    %610 = vmatpush2.msra.mxu0 0.0
    %611 = vmatprep.subr.mxu0 0.0
    %612 = vmatpush2.msra.mxu0 0.0
    %613 = vmatprep.subr.mxu0 0.0
    %614 = vmatpush2.msra.mxu0 0.0
    %615 = vmatprep.mubr.f32.mxu0 0.0
    %616 = vmatmul.mubr.f32.gmra.mxu0 %v549
    %v617 = vpop.f32.mrf.mxu0
    %v618 = vadd.f32 0.0, %v617
    %v619 = vpop.f32.mrf.mxu0
    %620 = vdwg.mxu0
    %v621 = vadd.f32 %v160, %v618
    %v622 = vtanh.pop %v621
    %623 = vst.msk [vmem:[#allocation2 + $0xa] sm:$0x3] %vm242, %v622
    %v625 = vsel %vm89, %v622, 0
    %627 = vmatprep.subr.mxu0 0.0
    %628 = vmatpush1.msra.mxu0 0.0
    %629 = vmatprep.subr.mxu0 0.0
    %630 = vmatpush1.msra.mxu0 0.0
    %631 = vmatprep.subr.mxu0 0.0
    %632 = vmatpush1.msra.mxu0 0.0
    %633 = vmatprep.subr.mxu0 0.0
    %634 = vmatpush1.msra.mxu0 0.0
    %635 = vmatprep.subr.mxu0 0.0
    %636 = vmatpush1.msra.mxu0 0.0
    %637 = vmatprep.subr.mxu0 0.0
    %638 = vmatpush1.msra.mxu0 0.0
    %639 = vmatprep.subr.mxu0 0.0
    %640 = vmatpush1.msra.mxu0 0.0
    %641 = vmatprep.subr.mxu0 0.0
    %642 = vmatpush1.msra.mxu0 0.0
    %643 = vmatprep.subr.mxu0 0.0
    %644 = vmatpush1.msra.mxu0 0.0
    %645 = vmatprep.subr.mxu0 0.0
    %646 = vmatpush1.msra.mxu0 0.0
    %647 = vmatprep.subr.mxu0 0.0
    %648 = vmatpush1.msra.mxu0 0.0
    %649 = vmatprep.subr.mxu0 0.0
    %650 = vmatpush1.msra.mxu0 0.0
    %651 = vmatprep.subr.mxu0 0.0
    %652 = vmatpush1.msra.mxu0 %v166
    %653 = vmatprep.subr.mxu0 0.0
    %654 = vmatpush1.msra.mxu0 %v165
    %655 = vmatprep.subr.mxu0 0.0
    %656 = vmatpush1.msra.mxu0 %v164
    %657 = vmatprep.subr.mxu0 0.0
    %658 = vmatpush1.msra.mxu0 %v163
    %659 = vmatprep.subr.mxu0 0.0
    %660 = vmatpush2.msra.mxu0 0.0
    %661 = vmatprep.subr.mxu0 0.0
    %662 = vmatpush2.msra.mxu0 0.0
    %663 = vmatprep.subr.mxu0 0.0
    %664 = vmatpush2.msra.mxu0 0.0
    %665 = vmatprep.subr.mxu0 0.0
    %666 = vmatpush2.msra.mxu0 0.0
    %667 = vmatprep.subr.mxu0 0.0
    %668 = vmatpush2.msra.mxu0 0.0
    %669 = vmatprep.subr.mxu0 0.0
    %670 = vmatpush2.msra.mxu0 0.0
    %671 = vmatprep.subr.mxu0 0.0
    %672 = vmatpush2.msra.mxu0 0.0
    %673 = vmatprep.subr.mxu0 0.0
    %674 = vmatpush2.msra.mxu0 0.0
    %675 = vmatprep.subr.mxu0 0.0
    %676 = vmatpush2.msra.mxu0 0.0
    %677 = vmatprep.subr.mxu0 0.0
    %678 = vmatpush2.msra.mxu0 0.0
    %679 = vmatprep.subr.mxu0 0.0
    %680 = vmatpush2.msra.mxu0 0.0
    %681 = vmatprep.subr.mxu0 0.0
    %682 = vmatpush2.msra.mxu0 0.0
    %683 = vmatprep.subr.mxu0 0.0
    %684 = vmatpush2.msra.mxu0 0.0
    %685 = vmatprep.subr.mxu0 0.0
    %686 = vmatpush2.msra.mxu0 0.0
    %687 = vmatprep.subr.mxu0 0.0
    %688 = vmatpush2.msra.mxu0 0.0
    %689 = vmatprep.subr.mxu0 0.0
    %690 = vmatpush2.msra.mxu0 0.0
    %691 = vmatprep.mubr.f32.mxu0 0.0
    %692 = vmatmul.mubr.f32.gmra.mxu0 %v625
    %v693 = vpop.f32.mrf.mxu0
    %v694 = vadd.f32 0.0, %v693
    %v695 = vpop.f32.mrf.mxu0
    %696 = vdwg.mxu0
    %v697 = vadd.f32 %v160, %v694
    %v698 = vtanh.pop %v697
    %699 = vst.msk [vmem:[#allocation2 + $0xc] sm:$0x3] %vm242, %v698
    %v701 = vsel %vm89, %v698, 0
    %703 = vmatprep.subr.mxu0 0.0
    %704 = vmatpush1.msra.mxu0 0.0
    %705 = vmatprep.subr.mxu0 0.0
    %706 = vmatpush1.msra.mxu0 0.0
    %707 = vmatprep.subr.mxu0 0.0
    %708 = vmatpush1.msra.mxu0 0.0
    %709 = vmatprep.subr.mxu0 0.0
    %710 = vmatpush1.msra.mxu0 0.0
    %711 = vmatprep.subr.mxu0 0.0
    %712 = vmatpush1.msra.mxu0 0.0
    %713 = vmatprep.subr.mxu0 0.0
    %714 = vmatpush1.msra.mxu0 0.0
    %715 = vmatprep.subr.mxu0 0.0
    %716 = vmatpush1.msra.mxu0 0.0
    %717 = vmatprep.subr.mxu0 0.0
    %718 = vmatpush1.msra.mxu0 0.0
    %719 = vmatprep.subr.mxu0 0.0
    %720 = vmatpush1.msra.mxu0 0.0
    %721 = vmatprep.subr.mxu0 0.0
    %722 = vmatpush1.msra.mxu0 0.0
    %723 = vmatprep.subr.mxu0 0.0
    %724 = vmatpush1.msra.mxu0 0.0
    %725 = vmatprep.subr.mxu0 0.0
    %726 = vmatpush1.msra.mxu0 0.0
    %727 = vmatprep.subr.mxu0 0.0
    %728 = vmatpush1.msra.mxu0 %v166
    %729 = vmatprep.subr.mxu0 0.0
    %730 = vmatpush1.msra.mxu0 %v165
    %731 = vmatprep.subr.mxu0 0.0
    %732 = vmatpush1.msra.mxu0 %v164
    %733 = vmatprep.subr.mxu0 0.0
    %734 = vmatpush1.msra.mxu0 %v163
    %735 = vmatprep.subr.mxu0 0.0
    %736 = vmatpush2.msra.mxu0 0.0
    %737 = vmatprep.subr.mxu0 0.0
    %738 = vmatpush2.msra.mxu0 0.0
    %739 = vmatprep.subr.mxu0 0.0
    %740 = vmatpush2.msra.mxu0 0.0
    %741 = vmatprep.subr.mxu0 0.0
    %742 = vmatpush2.msra.mxu0 0.0
    %743 = vmatprep.subr.mxu0 0.0
    %744 = vmatpush2.msra.mxu0 0.0
    %745 = vmatprep.subr.mxu0 0.0
    %746 = vmatpush2.msra.mxu0 0.0
    %747 = vmatprep.subr.mxu0 0.0
    %748 = vmatpush2.msra.mxu0 0.0
    %749 = vmatprep.subr.mxu0 0.0
    %750 = vmatpush2.msra.mxu0 0.0
    %751 = vmatprep.subr.mxu0 0.0
    %752 = vmatpush2.msra.mxu0 0.0
    %753 = vmatprep.subr.mxu0 0.0
    %754 = vmatpush2.msra.mxu0 0.0
    %755 = vmatprep.subr.mxu0 0.0
    %756 = vmatpush2.msra.mxu0 0.0
    %757 = vmatprep.subr.mxu0 0.0
    %758 = vmatpush2.msra.mxu0 0.0
    %759 = vmatprep.subr.mxu0 0.0
    %760 = vmatpush2.msra.mxu0 0.0
    %761 = vmatprep.subr.mxu0 0.0
    %762 = vmatpush2.msra.mxu0 0.0
    %763 = vmatprep.subr.mxu0 0.0
    %764 = vmatpush2.msra.mxu0 0.0
    %765 = vmatprep.subr.mxu0 0.0
    %766 = vmatpush2.msra.mxu0 0.0
    %767 = vmatprep.mubr.f32.mxu0 0.0
    %768 = vmatmul.mubr.f32.gmra.mxu0 %v701
    %v769 = vpop.f32.mrf.mxu0
    %v770 = vadd.f32 0.0, %v769
    %v771 = vpop.f32.mrf.mxu0
    %772 = vdwg.mxu0
    %v773 = vadd.f32 %v160, %v770
    %v774 = vtanh.pop %v773
    %775 = vst.msk [vmem:[#allocation2 + $0xe] sm:$0x3] %vm242, %v774
    %v776 = vld [vmem:[#allocation2] sm:$0xff]
    %v777 = vld [vmem:[#allocation2 + $0x8] sm:$0xff]
    %v778 = vld [vmem:[#allocation9] sm:$0xff]
    %v779 = vld [vmem:[#allocation9 + $0x8] sm:$0xff]
    %v780 = vld [vmem:[#allocation9 + $0x10] sm:$0xff]
    %v781 = vld [vmem:[#allocation9 + $0x18] sm:$0xff]
    %v782 = vld [vmem:[%s5] sm:$0x1]
    %v784 = vlaneseq
    %v785 = vshrl.u32 %v784, 7
    %v786 = vsub.s32 0, %v785
    %v787 = vrot.slane %v782, %v786
    %v790 = vsel %vm89, %v776, 0
    %v793 = vsel %vm89, %v777, 0
    %795 = vmatprep.subr.mxu0 0.0
    %796 = vmatpush1.msra.mxu0 0.0
    %797 = vmatprep.subr.mxu0 0.0
    %798 = vmatpush1.msra.mxu0 0.0
    %799 = vmatprep.subr.mxu0 0.0
    %800 = vmatpush1.msra.mxu0 0.0
    %801 = vmatprep.subr.mxu0 0.0
    %802 = vmatpush1.msra.mxu0 0.0
    %803 = vmatprep.subr.mxu0 0.0
    %804 = vmatpush1.msra.mxu0 0.0
    %805 = vmatprep.subr.mxu0 0.0
    %806 = vmatpush1.msra.mxu0 0.0
    %807 = vmatprep.subr.mxu0 0.0
    %808 = vmatpush1.msra.mxu0 0.0
    %809 = vmatprep.subr.mxu0 0.0
    %810 = vmatpush1.msra.mxu0 0.0
    %811 = vmatprep.subr.mxu0 0.0
    %812 = vmatpush1.msra.mxu0 0.0
    %813 = vmatprep.subr.mxu0 0.0
    %814 = vmatpush1.msra.mxu0 0.0
    %815 = vmatprep.subr.mxu0 0.0
    %816 = vmatpush1.msra.mxu0 0.0
    %817 = vmatprep.subr.mxu0 0.0
    %818 = vmatpush1.msra.mxu0 0.0
    %819 = vmatprep.subr.mxu0 0.0
    %820 = vmatpush1.msra.mxu0 %v781
    %821 = vmatprep.subr.mxu0 0.0
    %822 = vmatpush1.msra.mxu0 %v780
    %823 = vmatprep.subr.mxu0 0.0
    %824 = vmatpush1.msra.mxu0 %v779
    %825 = vmatprep.subr.mxu0 0.0
    %826 = vmatpush1.msra.mxu0 %v778
    %827 = vmatprep.subr.mxu0 0.0
    %828 = vmatpush2.msra.mxu0 0.0
    %829 = vmatprep.subr.mxu0 0.0
    %830 = vmatpush2.msra.mxu0 0.0
    %831 = vmatprep.subr.mxu0 0.0
    %832 = vmatpush2.msra.mxu0 0.0
    %833 = vmatprep.subr.mxu0 0.0
    %834 = vmatpush2.msra.mxu0 0.0
    %835 = vmatprep.subr.mxu0 0.0
    %836 = vmatpush2.msra.mxu0 0.0
    %837 = vmatprep.subr.mxu0 0.0
    %838 = vmatpush2.msra.mxu0 0.0
    %839 = vmatprep.subr.mxu0 0.0
    %840 = vmatpush2.msra.mxu0 0.0
    %841 = vmatprep.subr.mxu0 0.0
    %842 = vmatpush2.msra.mxu0 0.0
    %843 = vmatprep.subr.mxu0 0.0
    %844 = vmatpush2.msra.mxu0 0.0
    %845 = vmatprep.subr.mxu0 0.0
    %846 = vmatpush2.msra.mxu0 0.0
    %847 = vmatprep.subr.mxu0 0.0
    %848 = vmatpush2.msra.mxu0 0.0
    %849 = vmatprep.subr.mxu0 0.0
    %850 = vmatpush2.msra.mxu0 0.0
    %851 = vmatprep.subr.mxu0 0.0
    %852 = vmatpush2.msra.mxu0 0.0
    %853 = vmatprep.subr.mxu0 0.0
    %854 = vmatpush2.msra.mxu0 0.0
    %855 = vmatprep.subr.mxu0 0.0
    %856 = vmatpush2.msra.mxu0 0.0
    %857 = vmatprep.subr.mxu0 0.0
    %858 = vmatpush2.msra.mxu0 0.0
    %859 = vmatprep.mubr.f32.mxu0 0.0
    %860 = vmatmul.mubr.f32.gmra.mxu0 %v790
    %v861 = vpop.f32.mrf.mxu0
    %v862 = vadd.f32 %v787, %v861
    %v863 = vpop.f32.mrf.mxu0
    %864 = vmatprep.mubr.f32.mxu0 0.0
    %865 = vmatmul.mubr.f32.gmra.mxu0 %v793
    %v866 = vpop.f32.mrf.mxu0
    %v867 = vadd.f32 %v787, %v866
    %v868 = vpop.f32.mrf.mxu0
    %869 = vdwg.mxu0
    %870 = vst [vmem:[#allocation11] sm:$0xff] %v862
    %871 = vst [vmem:[#allocation11 + $0x8] sm:$0xff] %v867
    // Predicated region
    $region42: #{tpu_custom_call.1} parent=1 // pred_check
      _
    $region43: #{tpu_custom_call.1} parent=1 // pred_check_branch
      %873 = sbr.rel (0) target = $region45
    $region44: #{tpu_custom_call.1} parent=1 // pred_region
      %s875 = ssub.s32 256, 256
      %876 = vsyncadd [#allocation5], %s875
      %s877 = sshll.u32 [#allocation11], 4
      %s878 = int_to_ptr.vmem [resolvable:$true] %s877
      %883 = dma.vmem_to_hbm [thread:$0]  %s878, 256, %s6, [#allocation5], 128, 128, 8
    $region45: #{tpu_custom_call.1} parent=1 // pred_fallthru
      _
    // Predicated region
    $region46: #{tpu_custom_call.1} parent=1 // pred_check
      _
    $region47: #{tpu_custom_call.1} parent=1 // pred_check_branch
      %885 = sbr.rel (0) target = $region49
    $region48: #{tpu_custom_call.1} parent=1 // pred_region
      %886 = dma.done [#allocation5], 256
    $region49: #{tpu_custom_call.1} parent=1 // pred_fallthru
      _
    %887 = vsyncpa [#allocation4], 1
    %888 = vsyncpa [#allocation7], 1
    %889 = vsyncpa [#allocation10], 1
    %890 = vsyncpa [#allocation5], 1

</llo_original>
